<compile_context>
chip_gen: v7x
topology: tpu7x:2x2x1
jax: 0.10.0
libtpu: 0.0.40
codegen_flags: <defaults>
</compile_context>

<pallas_src>
import jax
import jax.numpy as jnp
from jax import lax
from jax.experimental import pallas as pl
from jax.experimental.pallas import tpu as pltpu

EMB_DIM = 640          # 5 * 128, lane-dense (multiple of 128)
N_CONDITIONS = 5
MASK_WIDTH = 128
_TILE_ROWS = 1024      # rows per tile when batch is large (multiple of 8)


def _csn_kernel(c_ref, x_ref, o_ref):
    """out = x * band_mask(c); mask synthesized in-kernel (no HBM mask read)."""
    c = c_ref[0]
    lo = c * MASK_WIDTH
    hi = lo + MASK_WIDTH
    col = lax.broadcasted_iota(jnp.int32, x_ref.shape, dimension=1)
    mask = jnp.logical_and(col >= lo, col < hi).astype(x_ref.dtype)
    o_ref[...] = x_ref[...] * mask


def conditional_simnet1d_batch(x: jnp.ndarray, c) -> jnp.ndarray:
    """x: (batch, 640) float, c: scalar int condition in [0, 5)."""
    batch, emb = x.shape
    assert emb == EMB_DIM, f"expected last dim {EMB_DIM}, got {emb}"
    c_idx = jnp.asarray(c, dtype=jnp.int32).reshape((1,))

    if batch <= _TILE_ROWS:
        tb = batch                       # block == full array: always legal
    else:
        tb = _TILE_ROWS                  # multiple of 8; ragged tail is masked
    grid = (pl.cdiv(batch, tb),)

    grid_spec = pltpu.PrefetchScalarGridSpec(
        num_scalar_prefetch=1,
        grid=grid,
        in_specs=[
            pl.BlockSpec((tb, EMB_DIM), lambda i, c_ref: (i, 0)),
        ],
        out_specs=pl.BlockSpec((tb, EMB_DIM), lambda i, c_ref: (i, 0)),
    )

    return pl.pallas_call(
        _csn_kernel,
        out_shape=jax.ShapeDtypeStruct((batch, EMB_DIM), x.dtype),
        grid_spec=grid_spec,
        compiler_params=pltpu.CompilerParams(
            dimension_semantics=("parallel",)),   # shard row tiles over TCs
    )(c_idx, x)


def _build_mask_table(batch: int) -> jnp.ndarray:
    """Reference-only: the PyTorch Embedding weights, shape (5, batch*640)."""
    ones_blk = jnp.ones((batch, MASK_WIDTH), dtype=jnp.float32)
    rows = []
    for c in range(N_CONDITIONS):
        left = jnp.zeros((batch, c * MASK_WIDTH), dtype=jnp.float32)
        right = jnp.zeros((batch, EMB_DIM - (c + 1) * MASK_WIDTH),
                          dtype=jnp.float32)
        rows.append(jnp.concatenate([left, ones_blk, right], axis=1).reshape(-1))
    return jnp.stack(rows, axis=0)


if __name__ == "__main__":
    batch = 8  # small demo size
    key = jax.random.PRNGKey(0)
    x = jax.random.normal(key, (batch, EMB_DIM), dtype=jnp.float32)

    ok = True
    mask_table = _build_mask_table(batch)
    for c_val in range(N_CONDITIONS):
        c = jnp.int32(c_val)
        out = jax.block_until_ready(conditional_simnet1d_batch(x, c))
        ref = x * mask_table[c_val].reshape(batch, EMB_DIM)
        ok = ok and (out.shape == (batch, EMB_DIM)) and bool(jnp.allclose(out, ref))

    assert ok, "mismatch vs PyTorch-style embedding-table reference"
    print("KERNEL_OK")
</pallas_src>

<mosaic_0001>
module attributes {stable_mosaic.version = 11 : i64} {
  func.func @_csn_kernel(%arg0: i32, %arg1: memref<1xi32, #tpu.memory_space<smem>>, %arg2: memref<8x640xf32, #tpu.memory_space<vmem>>, %arg3: memref<8x640xf32, #tpu.memory_space<vmem>>) attributes {dimension_semantics = [#tpu.dimension_semantics<parallel>], iteration_bounds = array<i64: 1>, scalar_prefetch = 1 : i64, scratch_operands = 0 : i64, tpu.core_type = #tpu.core_type<tc>, window_params = [{transform_indices = @transform_0, window_bounds = array<i64: 8, 640>}, {transform_indices = @transform_1, window_bounds = array<i64: 8, 640>}]} {
    %c0 = arith.constant 0 : index
    %0 = memref.load %arg1[%c0] : memref<1xi32, #tpu.memory_space<smem>>
    %c128_i32 = arith.constant 128 : i32
    %1 = arith.muli %0, %c128_i32 : i32
    %c128_i32_0 = arith.constant 128 : i32
    %2 = arith.addi %1, %c128_i32_0 : i32
    %3 = tpu.iota {dimensions = array<i32: 1>} : vector<8x640xi32>
    %4 = vector.broadcast %1 : i32 to vector<8x640xi32>
    %5 = arith.cmpi sge, %3, %4 : vector<8x640xi32>
    %6 = vector.broadcast %2 : i32 to vector<8x640xi32>
    %7 = arith.cmpi slt, %3, %6 : vector<8x640xi32>
    %8 = arith.andi %5, %7 : vector<8x640xi1>
    %9 = arith.extui %8 : vector<8x640xi1> to vector<8x640xi32>
    %10 = arith.sitofp %9 : vector<8x640xi32> to vector<8x640xf32>
    %c0_1 = arith.constant 0 : index
    %c0_2 = arith.constant 0 : index
    %11 = vector.load %arg2[%c0_1, %c0_2] : memref<8x640xf32, #tpu.memory_space<vmem>>, vector<8x640xf32>
    %12 = arith.mulf %11, %10 : vector<8x640xf32>
    %c0_3 = arith.constant 0 : index
    %c0_4 = arith.constant 0 : index
    %13 = vector.load %arg3[%c0_3, %c0_4] : memref<8x640xf32, #tpu.memory_space<vmem>>, vector<8x640xf32>
    tpu.vector_store %arg3[%c0_3, %c0_4], %12 {strides = array<i32>} : memref<8x640xf32, #tpu.memory_space<vmem>>, vector<8x640xf32>,
    return
  }
  func.func @transform_0(%arg0: i32, %arg1: memref<1xi32, #tpu.memory_space<smem>>) -> (i32, i32) {
    %c0_i32 = arith.constant 0 : i32
    %c0_i32_0 = arith.constant 0 : i32
    return %arg0, %c0_i32 : i32, i32
  }
  func.func @transform_1(%arg0: i32, %arg1: memref<1xi32, #tpu.memory_space<smem>>) -> (i32, i32) {
    %c0_i32 = arith.constant 0 : i32
    %c0_i32_0 = arith.constant 0 : i32
    return %arg0, %c0_i32 : i32, i32
  }
}

</mosaic_0001>

<llo_original>
// kernel: tpu_custom_call.1
$region0: #{tpu_custom_call.1}
  #allocation0 [shape = 'u32[]', space=smem, size = 0x4, offset = 0x4, fixed_abs, tag = 'smem constant byte address 0x4 - core index']
  #allocation1 [shape = 'u32[144,128]{1,0:T(1,128)}', space=vmem, size = 0x12000, scoped, tag = 'internal scratch']
  #allocation2 [shape = 's32[1]{0}', space=sflag, size = 0x4, scoped, tag = 'scoped memory for tpu_custom_call.1']
  #allocation3 [shape = 's32[1]{0:T(128)S(6)}', space=smem, size = 0x200, scoped, tag = 'prefetched SMEM operand 0']
  %s0 = inlined_call_operand.<no memory space> [shape: s32[1], index: 0, kind: input, shape index: {}]
  %s1 = inlined_call_operand.hbm [shape: f32[8,640], index: 1, kind: input, shape index: {}]
  %s2 = inlined_call_operand.hbm [shape: f32[8,640], index: 2, kind: output, shape index: {}]
  %s3 = sld [smem:[#allocation0]]
  $region18: #{tpu_custom_call.1} parent=0
    _
  %s5 = ssub.s32 1, %s3
  %s6 = scalar_select 0, %s5, %s3
  %7 = sst [smem:[#allocation3]] %s0
  $region1: #{tpu_custom_call.1} parent=0
    #allocation4 [shape = 'u8[20480]{0}', space=vmem, size = 0x5000, scoped, tag = 'input window, operand 1, single buffered']
    #allocation5 [shape = 's32[1]{0}', space=sflag, size = 0x4, scoped, tag = 'scoped memory for tpu_custom_call.1']
    #allocation6 [shape = 's32[1]{0}', space=sflag, size = 0x4, scoped, tag = 'scoped memory for tpu_custom_call.1']
    #allocation7 [shape = 'u8[20480]{0}', space=vmem, size = 0x5000, scoped, tag = 'output window, operand 0, single buffered']
    %8 = vsyncpa [#allocation5], 0
    %9 = vsyncpa [#allocation6], 0
    // Predicated region
    $region2: #{tpu_custom_call.1} parent=1 // pred_check
      _
    $region3: #{tpu_custom_call.1} parent=1 // pred_check_branch
      %11 = sbr.rel (0) target = $region5
    $region4: #{tpu_custom_call.1} parent=1 // pred_region
      %s13 = ssub.s32 640, 640
      %14 = vsyncadd [#allocation5], %s13
      %s16 = sshll.u32 [#allocation4], 4
      %s17 = int_to_ptr.vmem [resolvable:$true] %s16
      %19 = dma.hbm_to_vmem [thread:$0]  %s1, 640, %s17, [#allocation5]
    $region5: #{tpu_custom_call.1} parent=1 // pred_fallthru
      _
    // Predicated region
    $region6: #{tpu_custom_call.1} parent=1 // pred_check
      _
    $region7: #{tpu_custom_call.1} parent=1 // pred_check_branch
      %21 = sbr.rel (0) target = $region9
    $region8: #{tpu_custom_call.1} parent=1 // pred_region
      %22 = dma.done [#allocation5], 640
    $region9: #{tpu_custom_call.1} parent=1 // pred_fallthru
      _
    %s23 = sld [smem:[#allocation3]]
    %s24 = smul.u32 %s23, 128
    %s25 = sadd.s32 %s24, 128
    %v26 = vlaneseq
    %v27 = vand.u32 %v26, 127
    %v28 = vadd.s32 %v27, 128
    %v29 = vadd.s32 %v27, 256
    %v30 = vadd.s32 %v27, 384
    %v31 = vadd.s32 %v27, 512
    %v32 = vstv %s24
    %vm33 = vcmp.ge.s32.totalorder %v27, %v32
    %vm34 = vcmp.ge.s32.totalorder %v28, %v32
    %vm35 = vcmp.ge.s32.totalorder %v29, %v32
    %vm36 = vcmp.ge.s32.totalorder %v30, %v32
    %vm37 = vcmp.ge.s32.totalorder %v31, %v32
    %v38 = vstv %s25
    %vm39 = vcmp.lt.s32.totalorder %v27, %v38
    %vm40 = vcmp.lt.s32.totalorder %v28, %v38
    %vm41 = vcmp.lt.s32.totalorder %v29, %v38
    %vm42 = vcmp.lt.s32.totalorder %v30, %v38
    %vm43 = vcmp.lt.s32.totalorder %v31, %v38
    %vm44 = vmand %vm33, %vm39
    %vm45 = vmand %vm34, %vm40
    %vm46 = vmand %vm35, %vm41
    %vm47 = vmand %vm36, %vm42
    %vm48 = vmand %vm37, %vm43
    %v49 = vsel %vm44, 1, 0
    %v50 = vsel %vm45, 1, 0
    %v51 = vsel %vm46, 1, 0
    %v52 = vsel %vm47, 1, 0
    %v53 = vsel %vm48, 1, 0
    %v54 = vcvt.s32.f32 %v49
    %v55 = vcvt.s32.f32 %v50
    %v56 = vcvt.s32.f32 %v51
    %v57 = vcvt.s32.f32 %v52
    %v58 = vcvt.s32.f32 %v53
    %v59 = vld [vmem:[#allocation4] sm:$0xff]
    %v60 = vld [vmem:[#allocation4 + $0x8] sm:$0xff]
    %v61 = vld [vmem:[#allocation4 + $0x10] sm:$0xff]
    %v62 = vld [vmem:[#allocation4 + $0x18] sm:$0xff]
    %v63 = vld [vmem:[#allocation4 + $0x20] sm:$0xff]
    %v64 = vmul.f32 %v59, %v54
    %v65 = vmul.f32 %v60, %v55
    %v66 = vmul.f32 %v61, %v56
    %v67 = vmul.f32 %v62, %v57
    %v68 = vmul.f32 %v63, %v58
    %69 = vst [vmem:[#allocation7] sm:$0xff] %v64
    %70 = vst [vmem:[#allocation7 + $0x8] sm:$0xff] %v65
    %71 = vst [vmem:[#allocation7 + $0x10] sm:$0xff] %v66
    %72 = vst [vmem:[#allocation7 + $0x18] sm:$0xff] %v67
    %73 = vst [vmem:[#allocation7 + $0x20] sm:$0xff] %v68
    // Predicated region
    $region10: #{tpu_custom_call.1} parent=1 // pred_check
      _
    $region11: #{tpu_custom_call.1} parent=1 // pred_check_branch
      %75 = sbr.rel (0) target = $region13
    $region12: #{tpu_custom_call.1} parent=1 // pred_region
      %s77 = ssub.s32 640, 640
      %78 = vsyncadd [#allocation6], %s77
      %s80 = sshll.u32 [#allocation7], 4
      %s81 = int_to_ptr.vmem [resolvable:$true] %s80
      %83 = dma.vmem_to_hbm [thread:$0]  %s81, 640, %s2, [#allocation6]
    $region13: #{tpu_custom_call.1} parent=1 // pred_fallthru
      _
    // Predicated region
    $region14: #{tpu_custom_call.1} parent=1 // pred_check
      _
    $region15: #{tpu_custom_call.1} parent=1 // pred_check_branch
      %85 = sbr.rel (0) target = $region17
    $region16: #{tpu_custom_call.1} parent=1 // pred_region
      %86 = dma.done [#allocation6], 640
    $region17: #{tpu_custom_call.1} parent=1 // pred_fallthru
      _
    %87 = vsyncpa [#allocation5], 1
    %88 = vsyncpa [#allocation6], 1

</llo_original>
